<compile_context>
chip_gen: v7x
topology: tpu7x:2x2x1
jax: 0.10.0
libtpu: 0.0.40
codegen_flags: <defaults>
</compile_context>

<pallas_src>
import functools

import jax
import jax.numpy as jnp
from jax.experimental import pallas as pl
from jax.experimental.pallas import tpu as pltpu


def _round_up(x, m):
    return ((x + m - 1) // m) * m


def _default_vmem_limit_bytes():
    """~85% of the local chip's physical VMEM (v7x: ~54 MiB, v5e/v6e: ~109 MiB)."""
    cap = 64 * 1024 * 1024  # conservative fallback (v7x)
    try:
        cap = int(pltpu.get_tpu_info().vmem_capacity_bytes)
    except Exception:
        pass
    return int(cap * 0.85)


def _auto_b_tile(B):
    """Multiple of 8, up to 128, keeping >= 2 B blocks when B permits (v7x megacore)."""
    if B < 16:
        return 8
    return int(min(128, max(8, (B // 2) // 8 * 8)))


def _resident_spec(shape):
    """Constant-index weight/bias block: single-buffered (it never changes index)."""
    idx = lambda b, s: (0, 0)
    try:
        return pl.BlockSpec(shape, idx, pipeline_mode=pl.Buffered(1))
    except Exception:  # older jax without pipeline_mode / Buffered support
        return pl.BlockSpec(shape, idx)


# ---------------------------------------------------------------------------
# Tiled path: stream [B, S, H] over a (B, S) grid, accumulate pooled sum in f32,
# run the 2-layer MLP head once per B block at the last S step.
# ---------------------------------------------------------------------------
def _bert_mlp_tiled_kernel(hs_ref, w1_ref, b1_ref, w2_ref, b2_ref, out_ref, acc_ref,
                           *, inv_s, seq_len, s_tile, mask_s):
    # hs_ref : (b_tile, s_tile, H) input dtype   w1_ref: (H, A) bf16   b1_ref: (1, A) f32
    # w2_ref : (A, O) bf16                        b2_ref: (1, O) f32
    # out_ref: (b_tile, O) f32                    acc_ref: (b_tile, H) f32 scratch
    s = pl.program_id(1)

    @pl.when(s == 0)
    def _init():
        acc_ref[...] = jnp.zeros_like(acc_ref)

    x = hs_ref[...]
    if mask_s:
        # Last S block is partial: out-of-bounds rows hold garbage (possibly NaN/Inf),
        # so select them to zero (a multiply would propagate NaN) before reducing.
        row = jax.lax.broadcasted_iota(jnp.int32, (1, s_tile, 1), 1)
        valid = seq_len - s * s_tile  # >= 1 by construction of the cdiv grid
        x = jnp.where(row < valid, x, jnp.zeros((), x.dtype))

    acc_ref[...] += jnp.sum(x, axis=1, dtype=jnp.float32)

    @pl.when(s == pl.num_programs(1) - 1)
    def _finalize():
        pooled = (acc_ref[...] * inv_s).astype(jnp.bfloat16)            # (b_tile, H)
        h = jnp.dot(pooled, w1_ref[...], preferred_element_type=jnp.float32)
        h = jnp.maximum(h + b1_ref[...], 0.0)                           # (b_tile, A) f32
        logits = jnp.dot(h.astype(jnp.bfloat16), w2_ref[...],
                         preferred_element_type=jnp.float32)
        out_ref[...] = (logits + b2_ref[...]).astype(out_ref.dtype)     # (b_tile, O)


def _bert_mlp_head_tiled(hidden_states, w1, b1, w2, b2, *, b_tile=None, s_tile=None,
                         vmem_limit_bytes=None):
    B, S, H = hidden_states.shape
    A = w1.shape[1]
    O = w2.shape[1]

    if vmem_limit_bytes is None:
        vmem_limit_bytes = _default_vmem_limit_bytes()
    if b_tile is None:
        b_tile = _auto_b_tile(B)

    # bf16 weights: halves resident VMEM and weight DMA, native MXU rate.
    # Biases stay f32 (added after the f32-accumulated dots).  hidden_states is
    # streamed as-is (pass it in bf16 if the encoder already produces bf16).
    w1_bf = w1.astype(jnp.bfloat16)
    w2_bf = w2.astype(jnp.bfloat16)
    b1_2d = b1.reshape(1, A).astype(jnp.float32)
    b2_2d = b2.reshape(1, O).astype(jnp.float32)

    hs_item = jnp.dtype(hidden_states.dtype).itemsize
    if s_tile is None:
        # Single-buffered bf16 weights + (8-sublane padded) f32 biases + f32 acc
        # scratch + double-buffered f32 out blocks; the remaining VMEM budget funds
        # double-buffered hs blocks.
        resident = ((H * A + A * O) * 2
                    + 8 * (_round_up(A, 128) + _round_up(O, 128)) * 4
                    + b_tile * H * 4
                    + 2 * b_tile * _round_up(O, 128) * 4)
        budget = vmem_limit_bytes - resident - (4 << 20)   # headroom for compiler scratch
        per_s = 2 * b_tile * H * hs_item                   # double-buffered bytes / seq elem
        max_s = max(8, (budget // per_s) // 8 * 8) if budget > 0 else 8
        s_tile = int(min(_round_up(S, 8), max_s))
    s_tile = max(8, (int(s_tile) // 8) * 8)

    grid = (pl.cdiv(B, b_tile), pl.cdiv(S, s_tile))
    mask_s = (S % s_tile) != 0

    kernel = functools.partial(
        _bert_mlp_tiled_kernel,
        inv_s=1.0 / float(S), seq_len=S, s_tile=s_tile, mask_s=mask_s)

    return pl.pallas_call(
        kernel,
        out_shape=jax.ShapeDtypeStruct((B, O), jnp.float32),
        grid_spec=pltpu.PrefetchScalarGridSpec(
            num_scalar_prefetch=0,
            grid=grid,
            in_specs=[
                # streamed activations (double-buffered by default)
                pl.BlockSpec((b_tile, s_tile, H), lambda b, s: (b, s, 0)),
                # resident, single-buffered weights / biases
                _resident_spec((H, A)),
                _resident_spec((1, A)),
                _resident_spec((A, O)),
                _resident_spec((1, O)),
            ],
            # output resident across the S (reduction) axis, written at s == last
            out_specs=pl.BlockSpec((b_tile, O), lambda b, s: (b, 0)),
            scratch_shapes=[pltpu.VMEM((b_tile, H), jnp.float32)],
        ),
        compiler_params=pltpu.CompilerParams(
            dimension_semantics=("parallel", "arbitrary"),
            vmem_limit_bytes=int(vmem_limit_bytes),
        ),
    )(hidden_states, w1_bf, b1_2d, w2_bf, b2_2d)


# ---------------------------------------------------------------------------
# Small path: everything fits VMEM -> single grid point, full-array blocks, f32.
# (Padding/tiling tiny inputs is pure overhead.)
# ---------------------------------------------------------------------------
def _bert_mlp_small_kernel(hs_ref, w1_ref, b1_ref, w2_ref, b2_ref, out_ref, *, inv_s):
    pooled = jnp.sum(hs_ref[...].astype(jnp.float32), axis=1) * inv_s        # (B, H)
    h = jnp.dot(pooled, w1_ref[...].astype(jnp.float32),
                preferred_element_type=jnp.float32)
    h = jnp.maximum(h + b1_ref[...].astype(jnp.float32), 0.0)                # (B, A)
    logits = jnp.dot(h, w2_ref[...].astype(jnp.float32),
                     preferred_element_type=jnp.float32)
    out_ref[...] = (logits + b2_ref[...].astype(jnp.float32)).astype(out_ref.dtype)


def _bert_mlp_head_small(hidden_states, w1, b1, w2, b2):
    B, S, H = hidden_states.shape
    A = w1.shape[1]
    O = w2.shape[1]
    kernel = functools.partial(_bert_mlp_small_kernel, inv_s=1.0 / float(S))
    return pl.pallas_call(
        kernel,
        out_shape=jax.ShapeDtypeStruct((B, O), jnp.float32),
    )(hidden_states, w1, b1.reshape(1, A), w2, b2.reshape(1, O))


# ---------------------------------------------------------------------------
# Public entry: mean-pool over seq + 2-layer MLP head (x @ W + b, W stored [in,out]).
# ---------------------------------------------------------------------------
def bert_mlp_head(hidden_states, w1, b1, w2, b2, *, b_tile=None, s_tile=None,
                  vmem_limit_bytes=None):
    small = (hidden_states.size * jnp.dtype(hidden_states.dtype).itemsize) <= (2 << 20)
    if small:
        return _bert_mlp_head_small(hidden_states, w1, b1, w2, b2)
    return _bert_mlp_head_tiled(hidden_states, w1, b1, w2, b2, b_tile=b_tile,
                                s_tile=s_tile, vmem_limit_bytes=vmem_limit_bytes)


def init_linear_params(key, fan_in, fan_out):
    """Deterministic init mirroring nn.Linear default (uniform +-1/sqrt(fan_in))."""
    kw, kb = jax.random.split(key)
    bound = 1.0 / (fan_in ** 0.5)
    w = jax.random.uniform(kw, (fan_in, fan_out), jnp.float32, -bound, bound)
    b = jax.random.uniform(kb, (fan_out,), jnp.float32, -bound, bound)
    return w, b


if __name__ == "__main__":
    key = jax.random.PRNGKey(0)

    # ---- Test 1: small demo shapes (batch=2, seq=8, hidden=32, A=64, out=16) ----
    B, S, H, A, O = 2, 8, 32, 64, 16
    k_hs, k_l1, k_l2, k2 = jax.random.split(key, 4)

    hidden_states = jax.random.normal(k_hs, (B, S, H), jnp.float32)  # stand-in for
    # BertModel(...).last_hidden_state
    w1, b1 = init_linear_params(k_l1, H, A)   # Linear(hidden -> additional_hidden)
    w2, b2 = init_linear_params(k_l2, A, O)   # Linear(additional_hidden -> out_features)

    logits = jax.block_until_ready(bert_mlp_head(hidden_states, w1, b1, w2, b2))

    pooled_ref = hidden_states.mean(axis=1)
    h_ref = jnp.maximum(
        jnp.dot(pooled_ref, w1, precision=jax.lax.Precision.HIGHEST) + b1, 0.0)
    logits_ref = jnp.dot(h_ref, w2, precision=jax.lax.Precision.HIGHEST) + b2

    assert logits.shape == (B, O)
    assert jnp.allclose(logits, logits_ref, atol=1e-3, rtol=1e-3), "small-path mismatch"

    # ---- Test 2: exercise the tiled path (partial B and S blocks, bf16 weights) ----
    B2, S2, H2, A2, O2 = 12, 200, 256, 192, 24
    k_hs2, k_l1b, k_l2b = jax.random.split(k2, 3)
    hs2 = jax.random.normal(k_hs2, (B2, S2, H2), jnp.float32)
    w1b, b1b = init_linear_params(k_l1b, H2, A2)
    w2b, b2b = init_linear_params(k_l2b, A2, O2)

    logits2 = jax.block_until_ready(
        bert_mlp_head(hs2, w1b, b1b, w2b, b2b, s_tile=64))

    pooled2 = hs2.mean(axis=1)
    p_b = pooled2.astype(jnp.bfloat16).astype(jnp.float32)
    w1_b = w1b.astype(jnp.bfloat16).astype(jnp.float32)
    h2 = jnp.maximum(
        jnp.dot(p_b, w1_b, precision=jax.lax.Precision.HIGHEST) + b1b, 0.0)
    h2_b = h2.astype(jnp.bfloat16).astype(jnp.float32)
    w2_b = w2b.astype(jnp.bfloat16).astype(jnp.float32)
    logits2_ref = jnp.dot(h2_b, w2_b, precision=jax.lax.Precision.HIGHEST) + b2b

    assert logits2.shape == (B2, O2)
    assert jnp.allclose(logits2, logits2_ref, atol=2e-3, rtol=2e-3), "tiled-path mismatch"

    print("KERNEL_OK")
</pallas_src>

<mosaic_0001>
module attributes {stable_mosaic.version = 11 : i64} {
  func.func @_bert_mlp_small_kernel(%arg0: memref<2x8x32xf32, #tpu.memory_space<vmem>>, %arg1: memref<32x64xf32, #tpu.memory_space<vmem>>, %arg2: memref<1x64xf32, #tpu.memory_space<vmem>>, %arg3: memref<64x16xf32, #tpu.memory_space<vmem>>, %arg4: memref<1x16xf32, #tpu.memory_space<vmem>>, %arg5: memref<2x16xf32, #tpu.memory_space<vmem>>) attributes {dimension_semantics = [], scalar_prefetch = 0 : i64, scratch_operands = 0 : i64, tpu.core_type = #tpu.core_type<tc>} {
    %c0 = arith.constant 0 : index
    %c0_0 = arith.constant 0 : index
    %c0_1 = arith.constant 0 : index
    %0 = vector.load %arg0[%c0, %c0_0, %c0_1] : memref<2x8x32xf32, #tpu.memory_space<vmem>>, vector<2x8x32xf32>
    %cst = arith.constant dense<0.000000e+00> : vector<2x32xf32>
    %1 = vector.multi_reduction <add>, %0, %cst [1] : vector<2x8x32xf32> to vector<2x32xf32>
    %cst_2 = arith.constant 1.250000e-01 : f32
    %2 = vector.broadcast %cst_2 : f32 to vector<2x32xf32>
    %3 = arith.mulf %1, %2 : vector<2x32xf32>
    %c0_3 = arith.constant 0 : index
    %c0_4 = arith.constant 0 : index
    %4 = vector.load %arg1[%c0_3, %c0_4] : memref<32x64xf32, #tpu.memory_space<vmem>>, vector<32x64xf32>
    %cst_5 = arith.constant dense<0.000000e+00> : vector<2x64xf32>
    %5 = tpu.matmul %3, %4, %cst_5 {dimension_numbers = #tpu.dot_dimension_numbers<[1], [0], [0], [1], [0, 0, 1, 1], [], []>} : vector<2x32xf32>, vector<32x64xf32>, vector<2x64xf32> -> vector<2x64xf32>
    %c0_6 = arith.constant 0 : index
    %c0_7 = arith.constant 0 : index
    %6 = vector.load %arg2[%c0_6, %c0_7] : memref<1x64xf32, #tpu.memory_space<vmem>>, vector<1x64xf32>
    %7 = vector.broadcast %6 : vector<1x64xf32> to vector<2x64xf32>
    %8 = arith.addf %5, %7 : vector<2x64xf32>
    %cst_8 = arith.constant 0.000000e+00 : f32
    %9 = vector.broadcast %cst_8 : f32 to vector<2x64xf32>
    %10 = arith.maximumf %8, %9 : vector<2x64xf32>
    %c0_9 = arith.constant 0 : index
    %c0_10 = arith.constant 0 : index
    %11 = vector.load %arg3[%c0_9, %c0_10] : memref<64x16xf32, #tpu.memory_space<vmem>>, vector<64x16xf32>
    %cst_11 = arith.constant dense<0.000000e+00> : vector<2x16xf32>
    %12 = tpu.matmul %10, %11, %cst_11 {dimension_numbers = #tpu.dot_dimension_numbers<[1], [0], [0], [1], [0, 0, 1, 1], [], []>} : vector<2x64xf32>, vector<64x16xf32>, vector<2x16xf32> -> vector<2x16xf32>
    %c0_12 = arith.constant 0 : index
    %c0_13 = arith.constant 0 : index
    %13 = vector.load %arg4[%c0_12, %c0_13] : memref<1x16xf32, #tpu.memory_space<vmem>>, vector<1x16xf32>
    %14 = vector.broadcast %13 : vector<1x16xf32> to vector<2x16xf32>
    %15 = arith.addf %12, %14 : vector<2x16xf32>
    %c0_14 = arith.constant 0 : index
    %c0_15 = arith.constant 0 : index
    %16 = vector.load %arg5[%c0_14, %c0_15] : memref<2x16xf32, #tpu.memory_space<vmem>>, vector<2x16xf32>
    tpu.vector_store %arg5[%c0_14, %c0_15], %15 {strides = array<i32>} : memref<2x16xf32, #tpu.memory_space<vmem>>, vector<2x16xf32>,
    return
  }
}

</mosaic_0001>

<llo_original>
// kernel: tpu_custom_call.1
$region0: #{tpu_custom_call.1}
  #allocation0 [shape = 'u32[]', space=smem, size = 0x4, offset = 0x4, fixed_abs, tag = 'smem constant byte address 0x4 - core index']
  #allocation1 [shape = 'u32[144,128]{1,0:T(1,128)}', space=vmem, size = 0x12000, scoped, tag = 'internal scratch']
  %s0 = inlined_call_operand.vmem [shape: f32[2,8,32], index: 0, kind: input, shape index: {}]
  %s1 = inlined_call_operand.vmem [shape: f32[32,64], index: 1, kind: input, shape index: {}]
  %s2 = inlined_call_operand.vmem [shape: f32[1,64], index: 2, kind: input, shape index: {}]
  %s3 = inlined_call_operand.vmem [shape: f32[64,16], index: 3, kind: input, shape index: {}]
  %s4 = inlined_call_operand.vmem [shape: f32[1,16], index: 4, kind: input, shape index: {}]
  %s5 = inlined_call_operand.hbm [shape: f32[2,16], index: 5, kind: output, shape index: {}]
  %s6 = sld [smem:[#allocation0]]
  $region30: #{tpu_custom_call.1} parent=0
    _
  %s8 = ssub.s32 1, %s6
  %s9 = scalar_select 0, %s8, %s6
  $region1: #{tpu_custom_call.1} parent=0
    #allocation2 [shape = 'u8[1024]{0}', space=vmem, size = 0x400, scoped, tag = 'output window, operand 0, single buffered']
    #allocation3 [shape = 's32[1]{0}', space=sflag, size = 0x4, scoped, tag = 'scoped memory for tpu_custom_call.1']
    %10 = vsyncpa [#allocation3], 0
    // Predicated region
    $region2: #{tpu_custom_call.1} parent=1 // pred_check
      _
    $region3: #{tpu_custom_call.1} parent=1 // pred_check_branch
      %12 = sbr.rel (0) target = $region5
    $region4: #{tpu_custom_call.1} parent=1 // pred_region
      _
    $region5: #{tpu_custom_call.1} parent=1 // pred_fallthru
      _
    // Predicated region
    $region6: #{tpu_custom_call.1} parent=1 // pred_check
      _
    $region7: #{tpu_custom_call.1} parent=1 // pred_check_branch
      %14 = sbr.rel (0) target = $region9
    $region8: #{tpu_custom_call.1} parent=1 // pred_region
      _
    $region9: #{tpu_custom_call.1} parent=1 // pred_fallthru
      _
    // Predicated region
    $region10: #{tpu_custom_call.1} parent=1 // pred_check
      _
    $region11: #{tpu_custom_call.1} parent=1 // pred_check_branch
      %16 = sbr.rel (0) target = $region13
    $region12: #{tpu_custom_call.1} parent=1 // pred_region
      _
    $region13: #{tpu_custom_call.1} parent=1 // pred_fallthru
      _
    // Predicated region
    $region14: #{tpu_custom_call.1} parent=1 // pred_check
      _
    $region15: #{tpu_custom_call.1} parent=1 // pred_check_branch
      %18 = sbr.rel (0) target = $region17
    $region16: #{tpu_custom_call.1} parent=1 // pred_region
      _
    $region17: #{tpu_custom_call.1} parent=1 // pred_fallthru
      _
    // Predicated region
    $region18: #{tpu_custom_call.1} parent=1 // pred_check
      _
    $region19: #{tpu_custom_call.1} parent=1 // pred_check_branch
      %20 = sbr.rel (0) target = $region21
    $region20: #{tpu_custom_call.1} parent=1 // pred_region
      _
    $region21: #{tpu_custom_call.1} parent=1 // pred_fallthru
      _
    %v21 = vld [vmem:[%s0] sm:$0xff]
    %v22 = vld [vmem:[%s0 + $0x8] sm:$0xff]
    %vm23 = vcmask 261120
    %v24 = vsel %vm23, %v21, 0.0
    %v25 = vrot.slane %v24, 4
    %v26 = vadd.f32 %v24, %v25
    %v27 = vrot.slane %v26, 2
    %v28 = vadd.f32 %v26, %v27
    %v29 = vrot.slane %v28, 1
    %v30 = vadd.f32 %v28, %v29
    %v31 = vsel %vm23, %v22, 0.0
    %v32 = vrot.slane %v31, 4
    %v33 = vadd.f32 %v31, %v32
    %v34 = vrot.slane %v33, 2
    %v35 = vadd.f32 %v33, %v34
    %v36 = vrot.slane %v35, 1
    %v37 = vadd.f32 %v35, %v36
    %v38 = vmul.f32 %v30, 0.125
    %v39 = vmul.f32 %v37, 0.125
    %v40 = vld [vmem:[%s1] sm:$0xff]
    %v41 = vld [vmem:[%s1 + $0x8] sm:$0xff]
    %v42 = vld [vmem:[%s1 + $0x10] sm:$0xff]
    %v43 = vld [vmem:[%s1 + $0x18] sm:$0xff]
    %v44 = vld [vmem:[%s2] sm:$0x1]
    %v46 = vlaneseq
    %v47 = vshrl.u32 %v46, 7
    %v48 = vsub.s32 0, %v47
    %v49 = vrot.slane %v44, %v48
    %vm53 = vcmask 1041409
    %v54 = vsel %vm53, %v39, %v38
    %v55 = vsel %vm23, %v54, 0
    %57 = vmatprep.subr.mxu0 0.0
    %58 = vmatpush1.msra.mxu0 %v40
    %59 = vmatprep.subr.mxu0 0.0
    %60 = vmatpush1.msra.mxu0 %v41
    %61 = vmatprep.subr.mxu0 0.0
    %62 = vmatpush1.msra.mxu0 %v42
    %63 = vmatprep.subr.mxu0 0.0
    %64 = vmatpush1.msra.mxu0 %v43
    %65 = vmatprep.subr.mxu0 0.0
    %66 = vmatpush1.msra.mxu0 0.0
    %67 = vmatprep.subr.mxu0 0.0
    %68 = vmatpush1.msra.mxu0 0.0
    %69 = vmatprep.subr.mxu0 0.0
    %70 = vmatpush1.msra.mxu0 0.0
    %71 = vmatprep.subr.mxu0 0.0
    %72 = vmatpush1.msra.mxu0 0.0
    %73 = vmatprep.subr.mxu0 0.0
    %74 = vmatpush1.msra.mxu0 0.0
    %75 = vmatprep.subr.mxu0 0.0
    %76 = vmatpush1.msra.mxu0 0.0
    %77 = vmatprep.subr.mxu0 0.0
    %78 = vmatpush1.msra.mxu0 0.0
    %79 = vmatprep.subr.mxu0 0.0
    %80 = vmatpush1.msra.mxu0 0.0
    %81 = vmatprep.subr.mxu0 0.0
    %82 = vmatpush1.msra.mxu0 0.0
    %83 = vmatprep.subr.mxu0 0.0
    %84 = vmatpush1.msra.mxu0 0.0
    %85 = vmatprep.subr.mxu0 0.0
    %86 = vmatpush1.msra.mxu0 0.0
    %87 = vmatprep.subr.mxu0 0.0
    %88 = vmatpush1.msra.mxu0 0.0
    %89 = vmatprep.subr.mxu0 0.0
    %90 = vmatpush1.msra.mxu0 0.0
    %91 = vmatprep.subr.mxu0 0.0
    %92 = vmatpush1.msra.mxu0 0.0
    %93 = vmatprep.subr.mxu0 0.0
    %94 = vmatpush1.msra.mxu0 0.0
    %95 = vmatprep.subr.mxu0 0.0
    %96 = vmatpush1.msra.mxu0 0.0
    %97 = vmatprep.subr.mxu0 0.0
    %98 = vmatpush1.msra.mxu0 0.0
    %99 = vmatprep.subr.mxu0 0.0
    %100 = vmatpush1.msra.mxu0 0.0
    %101 = vmatprep.subr.mxu0 0.0
    %102 = vmatpush1.msra.mxu0 0.0
    %103 = vmatprep.subr.mxu0 0.0
    %104 = vmatpush1.msra.mxu0 0.0
    %105 = vmatprep.subr.mxu0 0.0
    %106 = vmatpush1.msra.mxu0 0.0
    %107 = vmatprep.subr.mxu0 0.0
    %108 = vmatpush1.msra.mxu0 0.0
    %109 = vmatprep.subr.mxu0 0.0
    %110 = vmatpush1.msra.mxu0 0.0
    %111 = vmatprep.subr.mxu0 0.0
    %112 = vmatpush1.msra.mxu0 0.0
    %113 = vmatprep.subr.mxu0 0.0
    %114 = vmatpush1.msra.mxu0 0.0
    %115 = vmatprep.subr.mxu0 0.0
    %116 = vmatpush1.msra.mxu0 0.0
    %117 = vmatprep.subr.mxu0 0.0
    %118 = vmatpush1.msra.mxu0 0.0
    %119 = vmatprep.subr.mxu0 0.0
    %120 = vmatpush1.msra.mxu0 0.0
    %121 = vmatprep.mubr.f32.mxu0 0.0
    %122 = vmatmul.mubr.f32.gmra.mrb[0].mxu0 %v55
    %v123 = vpop.f32.mrb[0].mxu0
    %v124 = vadd.f32 %v49, %v123
    %v125 = vpop.f32.mrb[0].mxu0
    %126 = vdwg.mxu0
    %v127 = vmax.f32 %v124, 0.0
    %v128 = vld [vmem:[%s3] sm:$0xff]
    %v129 = vld [vmem:[%s3 + $0x8] sm:$0xff]
    %v130 = vld [vmem:[%s3 + $0x10] sm:$0xff]
    %v131 = vld [vmem:[%s3 + $0x18] sm:$0xff]
    %v132 = vld [vmem:[%s3 + $0x20] sm:$0xff]
    %v133 = vld [vmem:[%s3 + $0x28] sm:$0xff]
    %v134 = vld [vmem:[%s3 + $0x30] sm:$0xff]
    %v135 = vld [vmem:[%s3 + $0x38] sm:$0xff]
    %v136 = vld [vmem:[%s4] sm:$0x1]
    %v138 = vlaneseq
    %v139 = vshrl.u32 %v138, 7
    %v140 = vsub.s32 0, %v139
    %v141 = vrot.slane %v136, %v140
    %vm143 = vcmask 523264
    %v145 = vsel %vm143, %v127, 0
    %147 = vmatprep.subr.mxu0 0.0
    %148 = vmatpush1.msra.mxu0 %v128
    %149 = vmatprep.subr.mxu0 0.0
    %150 = vmatpush1.msra.mxu0 %v129
    %151 = vmatprep.subr.mxu0 0.0
    %152 = vmatpush1.msra.mxu0 %v130
    %153 = vmatprep.subr.mxu0 0.0
    %154 = vmatpush1.msra.mxu0 %v131
    %155 = vmatprep.subr.mxu0 0.0
    %156 = vmatpush1.msra.mxu0 %v132
    %157 = vmatprep.subr.mxu0 0.0
    %158 = vmatpush1.msra.mxu0 %v133
    %159 = vmatprep.subr.mxu0 0.0
    %160 = vmatpush1.msra.mxu0 %v134
    %161 = vmatprep.subr.mxu0 0.0
    %162 = vmatpush1.msra.mxu0 %v135
    %163 = vmatprep.subr.mxu0 0.0
    %164 = vmatpush1.msra.mxu0 0.0
    %165 = vmatprep.subr.mxu0 0.0
    %166 = vmatpush1.msra.mxu0 0.0
    %167 = vmatprep.subr.mxu0 0.0
    %168 = vmatpush1.msra.mxu0 0.0
    %169 = vmatprep.subr.mxu0 0.0
    %170 = vmatpush1.msra.mxu0 0.0
    %171 = vmatprep.subr.mxu0 0.0
    %172 = vmatpush1.msra.mxu0 0.0
    %173 = vmatprep.subr.mxu0 0.0
    %174 = vmatpush1.msra.mxu0 0.0
    %175 = vmatprep.subr.mxu0 0.0
    %176 = vmatpush1.msra.mxu0 0.0
    %177 = vmatprep.subr.mxu0 0.0
    %178 = vmatpush1.msra.mxu0 0.0
    %179 = vmatprep.subr.mxu0 0.0
    %180 = vmatpush1.msra.mxu0 0.0
    %181 = vmatprep.subr.mxu0 0.0
    %182 = vmatpush1.msra.mxu0 0.0
    %183 = vmatprep.subr.mxu0 0.0
    %184 = vmatpush1.msra.mxu0 0.0
    %185 = vmatprep.subr.mxu0 0.0
    %186 = vmatpush1.msra.mxu0 0.0
    %187 = vmatprep.subr.mxu0 0.0
    %188 = vmatpush1.msra.mxu0 0.0
    %189 = vmatprep.subr.mxu0 0.0
    %190 = vmatpush1.msra.mxu0 0.0
    %191 = vmatprep.subr.mxu0 0.0
    %192 = vmatpush1.msra.mxu0 0.0
    %193 = vmatprep.subr.mxu0 0.0
    %194 = vmatpush1.msra.mxu0 0.0
    %195 = vmatprep.subr.mxu0 0.0
    %196 = vmatpush1.msra.mxu0 0.0
    %197 = vmatprep.subr.mxu0 0.0
    %198 = vmatpush1.msra.mxu0 0.0
    %199 = vmatprep.subr.mxu0 0.0
    %200 = vmatpush1.msra.mxu0 0.0
    %201 = vmatprep.subr.mxu0 0.0
    %202 = vmatpush1.msra.mxu0 0.0
    %203 = vmatprep.subr.mxu0 0.0
    %204 = vmatpush1.msra.mxu0 0.0
    %205 = vmatprep.subr.mxu0 0.0
    %206 = vmatpush1.msra.mxu0 0.0
    %207 = vmatprep.subr.mxu0 0.0
    %208 = vmatpush1.msra.mxu0 0.0
    %209 = vmatprep.subr.mxu0 0.0
    %210 = vmatpush1.msra.mxu0 0.0
    %211 = vmatprep.mubr.f32.mxu0 0.0
    %212 = vmatmul.mubr.f32.gmra.mrb[0].mxu0 %v145
    %v213 = vpop.f32.mrb[0].mxu0
    %v214 = vadd.f32 %v141, %v213
    %v215 = vpop.f32.mrb[0].mxu0
    %216 = vdwg.mxu0
    %vm217 = vcmask 123904
    %218 = vst.msk [vmem:[#allocation2] sm:$0x3] %vm217, %v214
    // Predicated region
    $region22: #{tpu_custom_call.1} parent=1 // pred_check
      _
    $region23: #{tpu_custom_call.1} parent=1 // pred_check_branch
      %220 = sbr.rel (0) target = $region25
    $region24: #{tpu_custom_call.1} parent=1 // pred_region
      %s222 = ssub.s32 32, 32
      %223 = vsyncadd [#allocation3], %s222
      %s225 = sshll.u32 [#allocation2], 4
      %s226 = int_to_ptr.vmem [resolvable:$true] %s225
      %228 = dma.vmem_to_hbm [thread:$0]  %s226, 32, %s5, [#allocation3]
    $region25: #{tpu_custom_call.1} parent=1 // pred_fallthru
      _
    // Predicated region
    $region26: #{tpu_custom_call.1} parent=1 // pred_check
      _
    $region27: #{tpu_custom_call.1} parent=1 // pred_check_branch
      %230 = sbr.rel (0) target = $region29
    $region28: #{tpu_custom_call.1} parent=1 // pred_region
      %231 = dma.done [#allocation3], 32
    $region29: #{tpu_custom_call.1} parent=1 // pred_fallthru
      _
    %232 = vsyncpa [#allocation3], 1

</llo_original>
